<compile_context>
chip_gen: v6e
topology: v6e:2x2x1
jax: 0.10.0
libtpu: 0.0.40
codegen_flags: <defaults>
</compile_context>

<pallas_src>
import jax
import jax.numpy as jnp
from jax.experimental import pallas as pl
from jax.experimental.pallas import tpu as pltpu  # noqa: F401  (TPU backend)

# ---- problem sizes (small, consistent with the module's forward) --------------
B, C_IN, H, W = 2, 4, 16, 16
VN = 9                       # number of keypoints -> vertex channels = 2*VN
C_VERT = 2 * VN              # 18
C_SEG = 2
C_OUT = C_VERT + C_SEG       # 20 (fused vertex|seg head)
HW = H * W                   # 256 pixels per image
NPIX = B * HW                # 512 pixels total (lane axis, 4 full lane tiles)


def pvnet_fused_kernel(x_ref, w_ref, b_ref, vgt_ref, mask_ref, out_ref, loss_ref):
    # x_ref:    (C_IN, NPIX)     lane-dense input, NPIX = B*H*W
    # w_ref:    (C_OUT, C_IN)    fused vertex|seg 1x1-conv weight
    # b_ref:    (C_OUT, 1)       fused bias
    # vgt_ref:  (C_VERT, NPIX)   vertex ground truth
    # mask_ref: (1, NPIX)        0/1 mask
    # out_ref:  (C_OUT, NPIX)    fused vertex|seg prediction (single store)
    # loss_ref: (1, 128)         [vote_loss, seg_loss, loss, 0, ...]

    # ---- fused 1x1-conv head: K=4 -> 4 VPU broadcast-FMAs (skip the MXU) ------
    out = b_ref[...] + w_ref[:, 0:1] * x_ref[0:1, :]
    for c in range(1, C_IN):                                # static unroll (3)
        out = out + w_ref[:, c:c + 1] * x_ref[c:c + 1, :]
    out_ref[...] = out                                      # one (20, 512) store

    vert = out[:C_VERT, :]                                  # read-side slices only
    l0 = out[C_VERT:C_VERT + 1, :]                          # seg logit, class 0
    l1 = out[C_VERT + 1:C_OUT, :]                           # seg logit, class 1

    # ---- vote loss: smooth_l1(pred*w, gt*w, reduction='sum'), beta=1.0 --------
    wb = mask_ref[...]                                      # (1, NPIX) 0/1
    d = (vert - vgt_ref[...]) * wb
    ad = jnp.abs(d)
    sl1 = jnp.where(ad < 1.0, 0.5 * d * d, ad - 0.5)
    sl1_sum = jnp.sum(sl1)
    w_sum = jnp.sum(wb)

    # ---- seg loss: 2-class CE == softplus(l_other - l_target) -----------------
    z = jnp.where(wb > 0.5, l0 - l1, l1 - l0)
    ce = jnp.maximum(z, 0.0) + jnp.log(1.0 + jnp.exp(-jnp.abs(z)))  # stable softplus
    ce_sum = jnp.sum(ce)

    # NOTE: matches PyTorch semantics exactly — an all-zero mask yields Inf/NaN
    # (same precondition as the reference implementation).
    vote_loss = sl1_sum / w_sum / jnp.float32(C_VERT)
    seg_loss = ce_sum / jnp.float32(NPIX)                   # CE default 'mean'
    total = vote_loss + seg_loss

    col = jax.lax.broadcasted_iota(jnp.int32, (1, 128), 1)
    loss_ref[...] = jnp.where(col == 0, vote_loss,
                              jnp.where(col == 1, seg_loss,
                                        jnp.where(col == 2, total, 0.0)))


def prepare_params(params):
    """Fuse the vertex/seg head weights ONCE (outside the per-step jit)."""
    wcat = jnp.concatenate([params['wv'], params['ws']], axis=1).T   # (C_OUT, C_IN)
    bcat = jnp.concatenate([params['bv'], params['bs']], axis=1).T   # (C_OUT, 1)
    return {'wcat': wcat, 'bcat': bcat}


@jax.jit
def _pvnet_step(inp, vertex_gt, mask, wcat, bcat):
    # NCHW -> channel-major lane-dense (C, B*H*W); tiny (<=40 KB) layout ops
    # fused into the same jit as the kernel call.
    x2 = jnp.transpose(inp, (1, 0, 2, 3)).reshape(C_IN, NPIX)
    vgt2 = jnp.transpose(vertex_gt, (1, 0, 2, 3)).reshape(C_VERT, NPIX)
    mask2 = mask.astype(jnp.float32).reshape(1, NPIX)

    # No grid: single invocation, whole arrays as full VMEM blocks (~120 KB).
    out2, losses = pl.pallas_call(
        pvnet_fused_kernel,
        out_shape=(
            jax.ShapeDtypeStruct((C_OUT, NPIX), jnp.float32),   # fused vertex|seg
            jax.ShapeDtypeStruct((1, 128), jnp.float32),        # losses
        ),
    )(x2, wcat, bcat, vgt2, mask2)

    out_nchw = jnp.transpose(out2.reshape(C_OUT, B, H, W), (1, 0, 2, 3))
    vertex = out_nchw[:, :C_VERT]
    seg = out_nchw[:, C_VERT:]
    return vertex, seg, losses[0, 0], losses[0, 1], losses[0, 2]


def network_wrapper_forward(batch, prepared):
    """Mirrors NetworkWrapper.forward (spherical_used=False)."""
    vertex, seg, vote_loss, seg_loss, loss = _pvnet_step(
        batch['inp'], batch['vertex'], batch['mask'],
        prepared['wcat'], prepared['bcat'])

    output = {'vertex': vertex, 'seg': seg}

    if 'pose_test' in batch.get('meta', {}):
        return output, jnp.float32(0.0), {}, {}

    scalar_stats = {'vote_loss': vote_loss, 'seg_loss': seg_loss, 'loss': loss}
    image_stats = {}
    return output, loss, scalar_stats, image_stats


def _reference(batch, params):
    """Pure-JAX reference of the same forward for a correctness check."""
    N = B * HW
    x_flat = jnp.transpose(batch['inp'], (0, 2, 3, 1)).reshape(N, C_IN)
    vgt = jnp.transpose(batch['vertex'], (0, 2, 3, 1)).reshape(N, C_VERT)
    w = batch['mask'].astype(jnp.float32).reshape(N, 1)
    vertex = x_flat @ params['wv'] + params['bv']
    seg = x_flat @ params['ws'] + params['bs']
    d = (vertex - vgt) * w
    ad = jnp.abs(d)
    sl1 = jnp.where(ad < 1.0, 0.5 * d * d, ad - 0.5)
    vote_loss = jnp.sum(sl1) / jnp.sum(w) / C_VERT
    lse = jax.scipy.special.logsumexp(seg, axis=-1)
    tgt = jnp.where(w[:, 0] > 0.5, seg[:, 1], seg[:, 0])
    seg_loss = jnp.mean(lse - tgt)
    vertex_nchw = jnp.transpose(vertex.reshape(B, H, W, C_VERT), (0, 3, 1, 2))
    seg_nchw = jnp.transpose(seg.reshape(B, H, W, C_SEG), (0, 3, 1, 2))
    return vote_loss, seg_loss, vote_loss + seg_loss, vertex_nchw, seg_nchw


if __name__ == "__main__":
    key = jax.random.PRNGKey(0)
    k_inp, k_vert, k_mask, k_wv, k_ws = jax.random.split(key, 5)

    batch = {
        'inp': jax.random.normal(k_inp, (B, C_IN, H, W), jnp.float32),
        'vertex': jax.random.normal(k_vert, (B, C_VERT, H, W), jnp.float32),
        'mask': (jax.random.uniform(k_mask, (B, H, W)) > 0.5).astype(jnp.float32),
        'meta': {},
    }
    # deterministic synthetic net parameters (1x1 conv heads)
    params = {
        'wv': 0.1 * jax.random.normal(k_wv, (C_IN, C_VERT), jnp.float32),
        'bv': jnp.zeros((1, C_VERT), jnp.float32),
        'ws': 0.1 * jax.random.normal(k_ws, (C_IN, C_SEG), jnp.float32),
        'bs': jnp.zeros((1, C_SEG), jnp.float32),
    }
    # Fused head weights prepared once, outside the per-step path.
    prepared = prepare_params(params)
    # TODO(synk): spherical branch (spherical_exp / spherical_abs_loss /
    # spherical_sign_loss) not implemented; this net has spherical_used=False.
    # TODO(synk): at real PVNet resolutions (e.g. 480x640) this no-grid design
    # must become an HW-tiled pipeline (grid over B*H*W with pl.when-gated
    # scalar-loss accumulation); not needed at these shapes.

    output, loss, scalar_stats, image_stats = network_wrapper_forward(batch, prepared)
    jax.block_until_ready(loss)

    # correctness check against pure-JAX reference
    v_ref, s_ref, l_ref, vert_ref, seg_ref = _reference(batch, params)
    assert jnp.allclose(scalar_stats['vote_loss'], v_ref, rtol=1e-5, atol=1e-5)
    assert jnp.allclose(scalar_stats['seg_loss'], s_ref, rtol=1e-5, atol=1e-5)
    assert jnp.allclose(loss, l_ref, rtol=1e-5, atol=1e-5)
    assert output['vertex'].shape == (B, C_VERT, H, W)
    assert output['seg'].shape == (B, C_SEG, H, W)
    assert jnp.allclose(output['vertex'], vert_ref, rtol=1e-4, atol=1e-4)
    assert jnp.allclose(output['seg'], seg_ref, rtol=1e-4, atol=1e-4)

    print("KERNEL_OK")
</pallas_src>

<mosaic_0001>
module attributes {stable_mosaic.version = 11 : i64} {
  func.func @pvnet_fused_kernel(%arg0: memref<4x512xf32, #tpu.memory_space<vmem>>, %arg1: memref<20x4xf32, #tpu.memory_space<vmem>>, %arg2: memref<20x1xf32, #tpu.memory_space<vmem>>, %arg3: memref<18x512xf32, #tpu.memory_space<vmem>>, %arg4: memref<1x512xf32, #tpu.memory_space<vmem>>, %arg5: memref<20x512xf32, #tpu.memory_space<vmem>>, %arg6: memref<1x128xf32, #tpu.memory_space<vmem>>) attributes {dimension_semantics = [], scalar_prefetch = 0 : i64, scratch_operands = 0 : i64, tpu.core_type = #tpu.core_type<tc>} {
    %c0 = arith.constant 0 : index
    %c0_0 = arith.constant 0 : index
    %0 = vector.load %arg2[%c0, %c0_0] : memref<20x1xf32, #tpu.memory_space<vmem>>, vector<20x1xf32>
    %c0_1 = arith.constant 0 : index
    %c0_2 = arith.constant 0 : index
    %1 = vector.load %arg1[%c0_1, %c0_2] : memref<20x4xf32, #tpu.memory_space<vmem>>, vector<20x1xf32>
    %c0_3 = arith.constant 0 : index
    %c0_4 = arith.constant 0 : index
    %2 = vector.load %arg0[%c0_3, %c0_4] : memref<4x512xf32, #tpu.memory_space<vmem>>, vector<1x512xf32>
    %3 = vector.broadcast %1 : vector<20x1xf32> to vector<20x512xf32>
    %4 = vector.broadcast %2 : vector<1x512xf32> to vector<20x512xf32>
    %5 = arith.mulf %3, %4 : vector<20x512xf32>
    %6 = vector.broadcast %0 : vector<20x1xf32> to vector<20x512xf32>
    %7 = arith.addf %6, %5 : vector<20x512xf32>
    %c0_5 = arith.constant 0 : index
    %c1 = arith.constant 1 : index
    %8 = vector.load %arg1[%c0_5, %c1] : memref<20x4xf32, #tpu.memory_space<vmem>>, vector<20x1xf32>
    %c1_6 = arith.constant 1 : index
    %c0_7 = arith.constant 0 : index
    %9 = vector.load %arg0[%c1_6, %c0_7] : memref<4x512xf32, #tpu.memory_space<vmem>>, vector<1x512xf32>
    %10 = vector.broadcast %8 : vector<20x1xf32> to vector<20x512xf32>
    %11 = vector.broadcast %9 : vector<1x512xf32> to vector<20x512xf32>
    %12 = arith.mulf %10, %11 : vector<20x512xf32>
    %13 = arith.addf %7, %12 : vector<20x512xf32>
    %c0_8 = arith.constant 0 : index
    %c2 = arith.constant 2 : index
    %14 = vector.load %arg1[%c0_8, %c2] : memref<20x4xf32, #tpu.memory_space<vmem>>, vector<20x1xf32>
    %c2_9 = arith.constant 2 : index
    %c0_10 = arith.constant 0 : index
    %15 = vector.load %arg0[%c2_9, %c0_10] : memref<4x512xf32, #tpu.memory_space<vmem>>, vector<1x512xf32>
    %16 = vector.broadcast %14 : vector<20x1xf32> to vector<20x512xf32>
    %17 = vector.broadcast %15 : vector<1x512xf32> to vector<20x512xf32>
    %18 = arith.mulf %16, %17 : vector<20x512xf32>
    %19 = arith.addf %13, %18 : vector<20x512xf32>
    %c0_11 = arith.constant 0 : index
    %c3 = arith.constant 3 : index
    %20 = vector.load %arg1[%c0_11, %c3] : memref<20x4xf32, #tpu.memory_space<vmem>>, vector<20x1xf32>
    %c3_12 = arith.constant 3 : index
    %c0_13 = arith.constant 0 : index
    %21 = vector.load %arg0[%c3_12, %c0_13] : memref<4x512xf32, #tpu.memory_space<vmem>>, vector<1x512xf32>
    %22 = vector.broadcast %20 : vector<20x1xf32> to vector<20x512xf32>
    %23 = vector.broadcast %21 : vector<1x512xf32> to vector<20x512xf32>
    %24 = arith.mulf %22, %23 : vector<20x512xf32>
    %25 = arith.addf %19, %24 : vector<20x512xf32>
    %c0_14 = arith.constant 0 : index
    %c0_15 = arith.constant 0 : index
    %26 = vector.load %arg5[%c0_14, %c0_15] : memref<20x512xf32, #tpu.memory_space<vmem>>, vector<20x512xf32>
    tpu.vector_store %arg5[%c0_14, %c0_15], %25 {strides = array<i32>} : memref<20x512xf32, #tpu.memory_space<vmem>>, vector<20x512xf32>,
    %27 = vector.extract_strided_slice %25 {offsets = [0, 0], sizes = [18, 512], strides = [1, 1]} : vector<20x512xf32> to vector<18x512xf32>
    %28 = vector.extract_strided_slice %25 {offsets = [18, 0], sizes = [1, 512], strides = [1, 1]} : vector<20x512xf32> to vector<1x512xf32>
    %29 = vector.extract_strided_slice %25 {offsets = [19, 0], sizes = [1, 512], strides = [1, 1]} : vector<20x512xf32> to vector<1x512xf32>
    %c0_16 = arith.constant 0 : index
    %c0_17 = arith.constant 0 : index
    %30 = vector.load %arg4[%c0_16, %c0_17] : memref<1x512xf32, #tpu.memory_space<vmem>>, vector<1x512xf32>
    %c0_18 = arith.constant 0 : index
    %c0_19 = arith.constant 0 : index
    %31 = vector.load %arg3[%c0_18, %c0_19] : memref<18x512xf32, #tpu.memory_space<vmem>>, vector<18x512xf32>
    %32 = arith.subf %27, %31 : vector<18x512xf32>
    %33 = vector.broadcast %30 : vector<1x512xf32> to vector<18x512xf32>
    %34 = arith.mulf %32, %33 : vector<18x512xf32>
    %35 = math.absf %34 : vector<18x512xf32>
    %cst = arith.constant 1.000000e+00 : f32
    %36 = vector.broadcast %cst : f32 to vector<18x512xf32>
    %37 = arith.cmpf olt, %35, %36 : vector<18x512xf32>
    %cst_20 = arith.constant 5.000000e-01 : f32
    %38 = vector.broadcast %cst_20 : f32 to vector<18x512xf32>
    %39 = arith.mulf %38, %34 : vector<18x512xf32>
    %40 = arith.mulf %39, %34 : vector<18x512xf32>
    %cst_21 = arith.constant 5.000000e-01 : f32
    %41 = vector.broadcast %cst_21 : f32 to vector<18x512xf32>
    %42 = arith.subf %35, %41 : vector<18x512xf32>
    %43 = arith.select %37, %40, %42 : vector<18x512xi1>, vector<18x512xf32>
    %44 = vector.shape_cast %43 : vector<18x512xf32> to vector<1x18x512xf32>
    %cst_22 = arith.constant dense<0.000000e+00> : vector<1xf32>
    %45 = vector.multi_reduction <add>, %44, %cst_22 [1, 2] : vector<1x18x512xf32> to vector<1xf32>
    %46 = vector.shape_cast %45 : vector<1xf32> to vector<1x1x1xf32>
    %47 = vector.extract %46[0, 0, 0] : f32 from vector<1x1x1xf32>
    %48 = vector.shape_cast %30 : vector<1x512xf32> to vector<1x1x512xf32>
    %cst_23 = arith.constant dense<0.000000e+00> : vector<1xf32>
    %49 = vector.multi_reduction <add>, %48, %cst_23 [1, 2] : vector<1x1x512xf32> to vector<1xf32>
    %50 = vector.shape_cast %49 : vector<1xf32> to vector<1x1x1xf32>
    %51 = vector.extract %50[0, 0, 0] : f32 from vector<1x1x1xf32>
    %cst_24 = arith.constant 5.000000e-01 : f32
    %52 = vector.broadcast %cst_24 : f32 to vector<1x512xf32>
    %53 = arith.cmpf ogt, %30, %52 : vector<1x512xf32>
    %54 = arith.subf %28, %29 : vector<1x512xf32>
    %55 = arith.subf %29, %28 : vector<1x512xf32>
    %56 = arith.select %53, %54, %55 : vector<1x512xi1>, vector<1x512xf32>
    %cst_25 = arith.constant 0.000000e+00 : f32
    %57 = vector.broadcast %cst_25 : f32 to vector<1x512xf32>
    %58 = arith.maximumf %56, %57 : vector<1x512xf32>
    %59 = math.absf %56 : vector<1x512xf32>
    %cst_26 = arith.constant 0.000000e+00 : f32
    %60 = vector.broadcast %cst_26 : f32 to vector<1x512xf32>
    %61 = arith.subf %60, %59 : vector<1x512xf32>
    %62 = math.exp %61 : vector<1x512xf32>
    %cst_27 = arith.constant 1.000000e+00 : f32
    %63 = vector.broadcast %cst_27 : f32 to vector<1x512xf32>
    %64 = arith.addf %63, %62 : vector<1x512xf32>
    %65 = math.log %64 : vector<1x512xf32>
    %66 = arith.addf %58, %65 : vector<1x512xf32>
    %67 = vector.shape_cast %66 : vector<1x512xf32> to vector<1x1x512xf32>
    %cst_28 = arith.constant dense<0.000000e+00> : vector<1xf32>
    %68 = vector.multi_reduction <add>, %67, %cst_28 [1, 2] : vector<1x1x512xf32> to vector<1xf32>
    %69 = vector.shape_cast %68 : vector<1xf32> to vector<1x1x1xf32>
    %70 = vector.extract %69[0, 0, 0] : f32 from vector<1x1x1xf32>
    %71 = arith.divf %47, %51 : f32
    %cst_29 = arith.constant 1.800000e+01 : f32
    %72 = arith.divf %71, %cst_29 : f32
    %cst_30 = arith.constant 5.120000e+02 : f32
    %73 = arith.divf %70, %cst_30 : f32
    %74 = arith.addf %72, %73 : f32
    %75 = tpu.iota {dimensions = array<i32: 1>} : vector<1x128xi32>
    %c0_i32 = arith.constant 0 : i32
    %76 = vector.broadcast %c0_i32 : i32 to vector<1x128xi32>
    %77 = arith.cmpi eq, %75, %76 : vector<1x128xi32>
    %c1_i32 = arith.constant 1 : i32
    %78 = vector.broadcast %c1_i32 : i32 to vector<1x128xi32>
    %79 = arith.cmpi eq, %75, %78 : vector<1x128xi32>
    %c2_i32 = arith.constant 2 : i32
    %80 = vector.broadcast %c2_i32 : i32 to vector<1x128xi32>
    %81 = arith.cmpi eq, %75, %80 : vector<1x128xi32>
    %cst_31 = arith.constant 0.000000e+00 : f32
    %82 = vector.broadcast %74 : f32 to vector<1x128xf32>
    %83 = vector.broadcast %cst_31 : f32 to vector<1x128xf32>
    %84 = arith.select %81, %82, %83 : vector<1x128xi1>, vector<1x128xf32>
    %85 = vector.broadcast %73 : f32 to vector<1x128xf32>
    %86 = arith.select %79, %85, %84 : vector<1x128xi1>, vector<1x128xf32>
    %87 = vector.broadcast %72 : f32 to vector<1x128xf32>
    %88 = arith.select %77, %87, %86 : vector<1x128xi1>, vector<1x128xf32>
    %c0_32 = arith.constant 0 : index
    %c0_33 = arith.constant 0 : index
    %89 = vector.load %arg6[%c0_32, %c0_33] : memref<1x128xf32, #tpu.memory_space<vmem>>, vector<1x128xf32>
    tpu.vector_store %arg6[%c0_32, %c0_33], %88 {strides = array<i32>} : memref<1x128xf32, #tpu.memory_space<vmem>>, vector<1x128xf32>,
    return
  }
}

</mosaic_0001>

<llo_original>
// kernel: _pvnet_step.1
$region0: #{_pvnet_step.1}
  #allocation0 [shape = 'u32[]', space=smem, size = 0x4, offset = 0x4, fixed_abs, tag = 'smem constant byte address 0x4 - core index']
  #allocation1 [shape = 'u32[144,128]{1,0:T(1,128)}', space=vmem, size = 0x12000, scoped, tag = 'internal scratch']
  %s0 = inlined_call_operand.vmem [shape: f32[4,512], index: 0, kind: input, shape index: {}]
  %s1 = inlined_call_operand.vmem [shape: f32[20,4], index: 1, kind: input, shape index: {}]
  %s2 = inlined_call_operand.vmem [shape: f32[20,1], index: 2, kind: input, shape index: {}]
  %s3 = inlined_call_operand.vmem [shape: f32[18,512], index: 3, kind: input, shape index: {}]
  %s4 = inlined_call_operand.vmem [shape: f32[1,512], index: 4, kind: input, shape index: {}]
  %s5 = inlined_call_operand.vmem [shape: f32[20,512], index: 5, kind: output, shape index: {0}]
  %s6 = inlined_call_operand.vmem [shape: f32[1,128], index: 6, kind: output, shape index: {1}]
  %7 = xla_tuple %s5, %s6
  %s8 = sld [smem:[#allocation0]]
  $region38: #{_pvnet_step.1} parent=0
    _
  %s10 = ssub.s32 1, %s8
  %s11 = scalar_select 0, %s10, %s8
  // Predicated region
  $region2: #{_pvnet_step.1} parent=0 // pred_check
    _
  $region3: #{_pvnet_step.1} parent=0 // pred_check_branch
    %13 = sbr.rel (0) target = $region5
  $region4: #{_pvnet_step.1} parent=0 // pred_region
    _
  $region5: #{_pvnet_step.1} parent=0 // pred_fallthru
    _
  // Predicated region
  $region6: #{_pvnet_step.1} parent=0 // pred_check
    _
  $region7: #{_pvnet_step.1} parent=0 // pred_check_branch
    %15 = sbr.rel (0) target = $region9
  $region8: #{_pvnet_step.1} parent=0 // pred_region
    _
  $region9: #{_pvnet_step.1} parent=0 // pred_fallthru
    _
  // Predicated region
  $region10: #{_pvnet_step.1} parent=0 // pred_check
    _
  $region11: #{_pvnet_step.1} parent=0 // pred_check_branch
    %17 = sbr.rel (0) target = $region13
  $region12: #{_pvnet_step.1} parent=0 // pred_region
    _
  $region13: #{_pvnet_step.1} parent=0 // pred_fallthru
    _
  // Predicated region
  $region14: #{_pvnet_step.1} parent=0 // pred_check
    _
  $region15: #{_pvnet_step.1} parent=0 // pred_check_branch
    %19 = sbr.rel (0) target = $region17
  $region16: #{_pvnet_step.1} parent=0 // pred_region
    _
  $region17: #{_pvnet_step.1} parent=0 // pred_fallthru
    _
  // Predicated region
  $region18: #{_pvnet_step.1} parent=0 // pred_check
    _
  $region19: #{_pvnet_step.1} parent=0 // pred_check_branch
    %21 = sbr.rel (0) target = $region21
  $region20: #{_pvnet_step.1} parent=0 // pred_region
    _
  $region21: #{_pvnet_step.1} parent=0 // pred_fallthru
    _
  %v22 = vld [vmem:[%s2] sm:$0xff]
  %v23 = vld [vmem:[%s2 + $0x8] sm:$0xff]
  %v24 = vld [vmem:[%s2 + $0x10] sm:$0xf]
  %v25 = vld [vmem:[%s1] sm:$0xff]
  %v26 = vld [vmem:[%s1 + $0x8] sm:$0xff]
  %v27 = vld [vmem:[%s1 + $0x10] sm:$0xf]
  %v28 = vld [vmem:[%s0] ss:$4 sm:$0xf]
  %30 = vset.pattern.permute.xlu0 0
  %31 = vperm.xlu0 %30, %v25
  %v32 = vpop.permute.xlu0 %31
  %35 = vset.pattern.permute.xlu0 0
  %36 = vperm.xlu0 %35, %v26
  %v37 = vpop.permute.xlu0 %36
  %40 = vset.pattern.permute.xlu0 0
  %41 = vperm.xlu0 %40, %v27
  %v42 = vpop.permute.xlu0 %41
  %v45 = vlaneseq
  %v46 = vshrl.u32 %v45, 7
  %v47 = vsub.s32 0, %v46
  %v48 = vrot.slane %v28, %v47
  %v49 = vlaneseq
  %v50 = vshrl.u32 %v49, 7
  %v51 = vsub.s32 1, %v50
  %v52 = vrot.slane %v28, %v51
  %v53 = vlaneseq
  %v54 = vshrl.u32 %v53, 7
  %v55 = vsub.s32 2, %v54
  %v56 = vrot.slane %v28, %v55
  %v57 = vlaneseq
  %v58 = vshrl.u32 %v57, 7
  %v59 = vsub.s32 3, %v58
  %v60 = vrot.slane %v28, %v59
  %v65 = vmul.f32 %v32, %v48
  %v66 = vmul.f32 %v32, %v52
  %v67 = vmul.f32 %v32, %v56
  %v68 = vmul.f32 %v32, %v60
  %v69 = vmul.f32 %v37, %v48
  %v70 = vmul.f32 %v37, %v52
  %v71 = vmul.f32 %v37, %v56
  %v72 = vmul.f32 %v37, %v60
  %v73 = vmul.f32 %v42, %v48
  %v74 = vmul.f32 %v42, %v52
  %v75 = vmul.f32 %v42, %v56
  %v76 = vmul.f32 %v42, %v60
  %78 = vset.pattern.permute.xlu0 0
  %79 = vperm.xlu0 %78, %v22
  %v80 = vpop.permute.xlu0 %79
  %83 = vset.pattern.permute.xlu0 0
  %84 = vperm.xlu0 %83, %v23
  %v85 = vpop.permute.xlu0 %84
  %88 = vset.pattern.permute.xlu0 0
  %89 = vperm.xlu0 %88, %v24
  %v90 = vpop.permute.xlu0 %89
  %v92 = vadd.f32 %v80, %v65
  %v93 = vadd.f32 %v80, %v66
  %v94 = vadd.f32 %v80, %v67
  %v95 = vadd.f32 %v80, %v68
  %v96 = vadd.f32 %v85, %v69
  %v97 = vadd.f32 %v85, %v70
  %v98 = vadd.f32 %v85, %v71
  %v99 = vadd.f32 %v85, %v72
  %v100 = vadd.f32 %v90, %v73
  %v101 = vadd.f32 %v90, %v74
  %v102 = vadd.f32 %v90, %v75
  %v103 = vadd.f32 %v90, %v76
  %s104 = scalar_lea.vmem %s0, 1
  %v105 = vld [vmem:[%s104] ss:$4 sm:$0xf]
  %106 = vset.pattern.permute.xlu0 1
  %107 = vperm.xlu0 %106, %v25
  %v108 = vpop.permute.xlu0 %107
  %110 = vset.pattern.permute.xlu0 1
  %111 = vperm.xlu0 %110, %v26
  %v112 = vpop.permute.xlu0 %111
  %114 = vset.pattern.permute.xlu0 1
  %115 = vperm.xlu0 %114, %v27
  %v116 = vpop.permute.xlu0 %115
  %v119 = vlaneseq
  %v120 = vshrl.u32 %v119, 7
  %v121 = vsub.s32 0, %v120
  %v122 = vrot.slane %v105, %v121
  %v123 = vlaneseq
  %v124 = vshrl.u32 %v123, 7
  %v125 = vsub.s32 1, %v124
  %v126 = vrot.slane %v105, %v125
  %v127 = vlaneseq
  %v128 = vshrl.u32 %v127, 7
  %v129 = vsub.s32 2, %v128
  %v130 = vrot.slane %v105, %v129
  %v131 = vlaneseq
  %v132 = vshrl.u32 %v131, 7
  %v133 = vsub.s32 3, %v132
  %v134 = vrot.slane %v105, %v133
  %v139 = vmul.f32 %v108, %v122
  %v140 = vmul.f32 %v108, %v126
  %v141 = vmul.f32 %v108, %v130
  %v142 = vmul.f32 %v108, %v134
  %v143 = vmul.f32 %v112, %v122
  %v144 = vmul.f32 %v112, %v126
  %v145 = vmul.f32 %v112, %v130
  %v146 = vmul.f32 %v112, %v134
  %v147 = vmul.f32 %v116, %v122
  %v148 = vmul.f32 %v116, %v126
  %v149 = vmul.f32 %v116, %v130
  %v150 = vmul.f32 %v116, %v134
  %v151 = vadd.f32 %v92, %v139
  %v152 = vadd.f32 %v93, %v140
  %v153 = vadd.f32 %v94, %v141
  %v154 = vadd.f32 %v95, %v142
  %v155 = vadd.f32 %v96, %v143
  %v156 = vadd.f32 %v97, %v144
  %v157 = vadd.f32 %v98, %v145
  %v158 = vadd.f32 %v99, %v146
  %v159 = vadd.f32 %v100, %v147
  %v160 = vadd.f32 %v101, %v148
  %v161 = vadd.f32 %v102, %v149
  %v162 = vadd.f32 %v103, %v150
  %s163 = scalar_lea.vmem %s0, 2
  %v164 = vld [vmem:[%s163] ss:$4 sm:$0xf]
  %165 = vset.pattern.permute.xlu0 2
  %166 = vperm.xlu0 %165, %v25
  %v167 = vpop.permute.xlu0 %166
  %169 = vset.pattern.permute.xlu0 2
  %170 = vperm.xlu0 %169, %v26
  %v171 = vpop.permute.xlu0 %170
  %173 = vset.pattern.permute.xlu0 2
  %174 = vperm.xlu0 %173, %v27
  %v175 = vpop.permute.xlu0 %174
  %v178 = vlaneseq
  %v179 = vshrl.u32 %v178, 7
  %v180 = vsub.s32 0, %v179
  %v181 = vrot.slane %v164, %v180
  %v182 = vlaneseq
  %v183 = vshrl.u32 %v182, 7
  %v184 = vsub.s32 1, %v183
  %v185 = vrot.slane %v164, %v184
  %v186 = vlaneseq
  %v187 = vshrl.u32 %v186, 7
  %v188 = vsub.s32 2, %v187
  %v189 = vrot.slane %v164, %v188
  %v190 = vlaneseq
  %v191 = vshrl.u32 %v190, 7
  %v192 = vsub.s32 3, %v191
  %v193 = vrot.slane %v164, %v192
  %v198 = vmul.f32 %v167, %v181
  %v199 = vmul.f32 %v167, %v185
  %v200 = vmul.f32 %v167, %v189
  %v201 = vmul.f32 %v167, %v193
  %v202 = vmul.f32 %v171, %v181
  %v203 = vmul.f32 %v171, %v185
  %v204 = vmul.f32 %v171, %v189
  %v205 = vmul.f32 %v171, %v193
  %v206 = vmul.f32 %v175, %v181
  %v207 = vmul.f32 %v175, %v185
  %v208 = vmul.f32 %v175, %v189
  %v209 = vmul.f32 %v175, %v193
  %v210 = vadd.f32 %v151, %v198
  %v211 = vadd.f32 %v152, %v199
  %v212 = vadd.f32 %v153, %v200
  %v213 = vadd.f32 %v154, %v201
  %v214 = vadd.f32 %v155, %v202
  %v215 = vadd.f32 %v156, %v203
  %v216 = vadd.f32 %v157, %v204
  %v217 = vadd.f32 %v158, %v205
  %v218 = vadd.f32 %v159, %v206
  %v219 = vadd.f32 %v160, %v207
  %v220 = vadd.f32 %v161, %v208
  %v221 = vadd.f32 %v162, %v209
  %s222 = scalar_lea.vmem %s0, 3
  %v223 = vld [vmem:[%s222] ss:$4 sm:$0xf]
  %224 = vset.pattern.permute.xlu0 3
  %225 = vperm.xlu0 %224, %v25
  %v226 = vpop.permute.xlu0 %225
  %228 = vset.pattern.permute.xlu0 3
  %229 = vperm.xlu0 %228, %v26
  %v230 = vpop.permute.xlu0 %229
  %232 = vset.pattern.permute.xlu0 3
  %233 = vperm.xlu0 %232, %v27
  %v234 = vpop.permute.xlu0 %233
  %v237 = vlaneseq
  %v238 = vshrl.u32 %v237, 7
  %v239 = vsub.s32 0, %v238
  %v240 = vrot.slane %v223, %v239
  %v241 = vlaneseq
  %v242 = vshrl.u32 %v241, 7
  %v243 = vsub.s32 1, %v242
  %v244 = vrot.slane %v223, %v243
  %v245 = vlaneseq
  %v246 = vshrl.u32 %v245, 7
  %v247 = vsub.s32 2, %v246
  %v248 = vrot.slane %v223, %v247
  %v249 = vlaneseq
  %v250 = vshrl.u32 %v249, 7
  %v251 = vsub.s32 3, %v250
  %v252 = vrot.slane %v223, %v251
  %v257 = vmul.f32 %v226, %v240
  %v258 = vmul.f32 %v226, %v244
  %v259 = vmul.f32 %v226, %v248
  %v260 = vmul.f32 %v226, %v252
  %v261 = vmul.f32 %v230, %v240
  %v262 = vmul.f32 %v230, %v244
  %v263 = vmul.f32 %v230, %v248
  %v264 = vmul.f32 %v230, %v252
  %v265 = vmul.f32 %v234, %v240
  %v266 = vmul.f32 %v234, %v244
  %v267 = vmul.f32 %v234, %v248
  %v268 = vmul.f32 %v234, %v252
  %v269 = vadd.f32 %v210, %v257
  %v270 = vadd.f32 %v211, %v258
  %v271 = vadd.f32 %v212, %v259
  %v272 = vadd.f32 %v213, %v260
  %v273 = vadd.f32 %v214, %v261
  %v274 = vadd.f32 %v215, %v262
  %v275 = vadd.f32 %v216, %v263
  %v276 = vadd.f32 %v217, %v264
  %v277 = vadd.f32 %v218, %v265
  %v278 = vadd.f32 %v219, %v266
  %v279 = vadd.f32 %v220, %v267
  %v280 = vadd.f32 %v221, %v268
  %281 = vst [vmem:[%s5] sm:$0xff] %v269
  %282 = vst [vmem:[%s5 + $0x8] sm:$0xff] %v270
  %283 = vst [vmem:[%s5 + $0x10] sm:$0xff] %v271
  %284 = vst [vmem:[%s5 + $0x18] sm:$0xff] %v272
  %285 = vst [vmem:[%s5 + $0x20] sm:$0xff] %v273
  %286 = vst [vmem:[%s5 + $0x28] sm:$0xff] %v274
  %287 = vst [vmem:[%s5 + $0x30] sm:$0xff] %v275
  %288 = vst [vmem:[%s5 + $0x38] sm:$0xff] %v276
  %289 = vst [vmem:[%s5 + $0x40] sm:$0xf] %v277
  %290 = vst [vmem:[%s5 + $0x48] sm:$0xf] %v278
  %291 = vst [vmem:[%s5 + $0x50] sm:$0xf] %v279
  %292 = vst [vmem:[%s5 + $0x58] sm:$0xf] %v280
  %v293 = vld [vmem:[%s4] sm:$0xf]
  %v294 = vld [vmem:[%s3] sm:$0xff]
  %v295 = vld [vmem:[%s3 + $0x8] sm:$0xff]
  %v296 = vld [vmem:[%s3 + $0x10] sm:$0xff]
  %v297 = vld [vmem:[%s3 + $0x18] sm:$0xff]
  %v298 = vld [vmem:[%s3 + $0x20] sm:$0xff]
  %v299 = vld [vmem:[%s3 + $0x28] sm:$0xff]
  %v300 = vld [vmem:[%s3 + $0x30] sm:$0xff]
  %v301 = vld [vmem:[%s3 + $0x38] sm:$0xff]
  %v302 = vld [vmem:[%s3 + $0x40] sm:$0x3]
  %v303 = vld [vmem:[%s3 + $0x48] sm:$0x3]
  %v304 = vld [vmem:[%s3 + $0x50] sm:$0x3]
  %v305 = vld [vmem:[%s3 + $0x58] sm:$0x3]
  %v306 = vsub.f32 %v269, %v294
  %v307 = vsub.f32 %v270, %v295
  %v308 = vsub.f32 %v271, %v296
  %v309 = vsub.f32 %v272, %v297
  %v310 = vsub.f32 %v273, %v298
  %v311 = vsub.f32 %v274, %v299
  %v312 = vsub.f32 %v275, %v300
  %v313 = vsub.f32 %v276, %v301
  %v314 = vsub.f32 %v277, %v302
  %v315 = vsub.f32 %v278, %v303
  %v316 = vsub.f32 %v279, %v304
  %v317 = vsub.f32 %v280, %v305
  %v319 = vlaneseq
  %v320 = vshrl.u32 %v319, 7
  %v321 = vsub.s32 0, %v320
  %v322 = vrot.slane %v293, %v321
  %v323 = vlaneseq
  %v324 = vshrl.u32 %v323, 7
  %v325 = vsub.s32 1, %v324
  %v326 = vrot.slane %v293, %v325
  %v327 = vlaneseq
  %v328 = vshrl.u32 %v327, 7
  %v329 = vsub.s32 2, %v328
  %v330 = vrot.slane %v293, %v329
  %v331 = vlaneseq
  %v332 = vshrl.u32 %v331, 7
  %v333 = vsub.s32 3, %v332
  %v334 = vrot.slane %v293, %v333
  %v339 = vmul.f32 %v306, %v322
  %v340 = vmul.f32 %v307, %v326
  %v341 = vmul.f32 %v308, %v330
  %v342 = vmul.f32 %v309, %v334
  %v343 = vmul.f32 %v310, %v322
  %v344 = vmul.f32 %v311, %v326
  %v345 = vmul.f32 %v312, %v330
  %v346 = vmul.f32 %v313, %v334
  %v347 = vmul.f32 %v314, %v322
  %v348 = vmul.f32 %v315, %v326
  %v349 = vmul.f32 %v316, %v330
  %v350 = vmul.f32 %v317, %v334
  %v351 = vand.u32 2147483647, %v339
  %v352 = vand.u32 2147483647, %v340
  %v353 = vand.u32 2147483647, %v341
  %v354 = vand.u32 2147483647, %v342
  %v355 = vand.u32 2147483647, %v343
  %v356 = vand.u32 2147483647, %v344
  %v357 = vand.u32 2147483647, %v345
  %v358 = vand.u32 2147483647, %v346
  %v359 = vand.u32 2147483647, %v347
  %v360 = vand.u32 2147483647, %v348
  %v361 = vand.u32 2147483647, %v349
  %v362 = vand.u32 2147483647, %v350
  %vm363 = vcmp.lt.f32.partialorder %v351, 1.0
  %vm364 = vcmp.lt.f32.partialorder %v352, 1.0
  %vm365 = vcmp.lt.f32.partialorder %v353, 1.0
  %vm366 = vcmp.lt.f32.partialorder %v354, 1.0
  %vm367 = vcmp.lt.f32.partialorder %v355, 1.0
  %vm368 = vcmp.lt.f32.partialorder %v356, 1.0
  %vm369 = vcmp.lt.f32.partialorder %v357, 1.0
  %vm370 = vcmp.lt.f32.partialorder %v358, 1.0
  %vm371 = vcmp.lt.f32.partialorder %v359, 1.0
  %vm372 = vcmp.lt.f32.partialorder %v360, 1.0
  %vm373 = vcmp.lt.f32.partialorder %v361, 1.0
  %vm374 = vcmp.lt.f32.partialorder %v362, 1.0
  %v375 = vmul.f32 %v339, 0.5
  %v376 = vmul.f32 %v340, 0.5
  %v377 = vmul.f32 %v341, 0.5
  %v378 = vmul.f32 %v342, 0.5
  %v379 = vmul.f32 %v343, 0.5
  %v380 = vmul.f32 %v344, 0.5
  %v381 = vmul.f32 %v345, 0.5
  %v382 = vmul.f32 %v346, 0.5
  %v383 = vmul.f32 %v347, 0.5
  %v384 = vmul.f32 %v348, 0.5
  %v385 = vmul.f32 %v349, 0.5
  %v386 = vmul.f32 %v350, 0.5
  %v387 = vmul.f32 %v375, %v339
  %v388 = vmul.f32 %v376, %v340
  %v389 = vmul.f32 %v377, %v341
  %v390 = vmul.f32 %v378, %v342
  %v391 = vmul.f32 %v379, %v343
  %v392 = vmul.f32 %v380, %v344
  %v393 = vmul.f32 %v381, %v345
  %v394 = vmul.f32 %v382, %v346
  %v395 = vmul.f32 %v383, %v347
  %v396 = vmul.f32 %v384, %v348
  %v397 = vmul.f32 %v385, %v349
  %v398 = vmul.f32 %v386, %v350
  %v399 = vsub.f32 %v351, 0.5
  %v400 = vsub.f32 %v352, 0.5
  %v401 = vsub.f32 %v353, 0.5
  %v402 = vsub.f32 %v354, 0.5
  %v403 = vsub.f32 %v355, 0.5
  %v404 = vsub.f32 %v356, 0.5
  %v405 = vsub.f32 %v357, 0.5
  %v406 = vsub.f32 %v358, 0.5
  %v407 = vsub.f32 %v359, 0.5
  %v408 = vsub.f32 %v360, 0.5
  %v409 = vsub.f32 %v361, 0.5
  %v410 = vsub.f32 %v362, 0.5
  %v411 = vsel %vm363, %v387, %v399
  %v412 = vsel %vm364, %v388, %v400
  %v413 = vsel %vm365, %v389, %v401
  %v414 = vsel %vm366, %v390, %v402
  %v415 = vsel %vm367, %v391, %v403
  %v416 = vsel %vm368, %v392, %v404
  %v417 = vsel %vm369, %v393, %v405
  %v418 = vsel %vm370, %v394, %v406
  %v419 = vsel %vm371, %v395, %v407
  %v420 = vsel %vm372, %v396, %v408
  %v421 = vsel %vm373, %v397, %v409
  %v422 = vsel %vm374, %v398, %v410
  %v423 = vadd.f32 %v411, %v412
  %v424 = vadd.f32 %v423, %v413
  %v425 = vadd.f32 %v424, %v414
  %v426 = vadd.f32 %v425, %v415
  %v427 = vadd.f32 %v426, %v416
  %v428 = vadd.f32 %v427, %v417
  %v429 = vadd.f32 %v428, %v418
  %vm430 = vcmask 1041408
  %v431 = vsel %vm430, %v419, 0.0
  %v432 = vadd.f32 %v429, %v431
  %v433 = vsel %vm430, %v420, 0.0
  %v434 = vadd.f32 %v432, %v433
  %v435 = vsel %vm430, %v421, 0.0
  %v436 = vadd.f32 %v434, %v435
  %v437 = vsel %vm430, %v422, 0.0
  %v438 = vadd.f32 %v436, %v437
  %439 = vadd.xlane.f32.xlu0 %v438
  %v440 = vpop.xlane.xlu0 %439
  %v441 = vrot.slane %v440, 4
  %v442 = vadd.f32 %v440, %v441
  %v443 = vrot.slane %v442, 2
  %v444 = vadd.f32 %v442, %v443
  %v445 = vrot.slane %v444, 1
  %v446 = vadd.f32 %v444, %v445
  %s447 = vtos %v446
  %vm448 = vcmask 1040384
  %v449 = vsel %vm448, %v322, 0.0
  %v450 = vsel %vm448, %v326, 0.0
  %v451 = vadd.f32 %v449, %v450
  %v452 = vsel %vm448, %v330, 0.0
  %v453 = vadd.f32 %v451, %v452
  %v454 = vsel %vm448, %v334, 0.0
  %v455 = vadd.f32 %v453, %v454
  %456 = vadd.xlane.f32.xlu0 %v455
  %v457 = vpop.xlane.xlu0 %456
  %v458 = vrot.slane %v457, 4
  %v459 = vadd.f32 %v457, %v458
  %v460 = vrot.slane %v459, 2
  %v461 = vadd.f32 %v459, %v460
  %v462 = vrot.slane %v461, 1
  %v463 = vadd.f32 %v461, %v462
  %s464 = vtos %v463
  %vm465 = vcmp.gt.f32.partialorder %v293, 0.5
  %v470 = vrot.slane %v277, 1
  %v471 = vrot.slane %v278, 1
  %v472 = vrot.slane %v279, 1
  %v473 = vrot.slane %v280, 1
  %v478 = vsub.f32 %v277, %v470
  %v479 = vsub.f32 %v278, %v471
  %v480 = vsub.f32 %v279, %v472
  %v481 = vsub.f32 %v280, %v473
  %v482 = vrot.slane %v277, 7
  %v483 = vrot.slane %v278, 7
  %v484 = vrot.slane %v279, 7
  %v485 = vrot.slane %v280, 7
  %v490 = vsub.f32 %v277, %v482
  %v491 = vsub.f32 %v278, %v483
  %v492 = vsub.f32 %v279, %v484
  %v493 = vsub.f32 %v280, %v485
  %v498 = vcombine.low %v478, %v479
  %v499 = vcombine.low %v480, %v481
  %v501 = vunpack.c.l.s4 1966171168
  %v502 = vunpack.c.0.s8 %v501
  %v503 = vlaneseq
  %v504 = vshrl.u32 %v503, 7
  %v505 = vsub.s32 %v502, %v504
  %v506 = vrot.slane %v498, %v505
  %v508 = vunpack.c.l.s4 1966171168
  %v509 = vunpack.c.0.s8 %v508
  %v510 = vlaneseq
  %v511 = vshrl.u32 %v510, 7
  %v512 = vsub.s32 %v509, %v511
  %v513 = vrot.slane %v499, %v512
  %v514 = vcombine.low %v506, %v513
  %v516 = vunpack.c.l.s4 1966171168
  %v517 = vunpack.c.0.s8 %v516
  %v518 = vlaneseq
  %v519 = vshrl.u32 %v518, 7
  %v520 = vsub.s32 %v517, %v519
  %v521 = vrot.slane %v514, %v520
  %v522 = vcombine.high %v521, %v521
  %v528 = vcombine.low %v490, %v491
  %v529 = vcombine.low %v492, %v493
  %v531 = vunpack.c.l.s4 1966171168
  %v532 = vunpack.c.0.s8 %v531
  %v533 = vlaneseq
  %v534 = vshrl.u32 %v533, 7
  %v535 = vsub.s32 %v532, %v534
  %v536 = vrot.slane %v528, %v535
  %v538 = vunpack.c.l.s4 1966171168
  %v539 = vunpack.c.0.s8 %v538
  %v540 = vlaneseq
  %v541 = vshrl.u32 %v540, 7
  %v542 = vsub.s32 %v539, %v541
  %v543 = vrot.slane %v529, %v542
  %v544 = vcombine.high %v536, %v543
  %v546 = vunpack.c.l.s4 1966171168
  %v547 = vunpack.c.0.s8 %v546
  %v548 = vlaneseq
  %v549 = vshrl.u32 %v548, 7
  %v550 = vsub.s32 %v547, %v549
  %v551 = vrot.slane %v544, %v550
  %v552 = vcombine.high %v551, %v551
  %v554 = vsel %vm465, %v522, %v552
  %v555 = vmax.f32 %v554, 0.0
  %v556 = vand.u32 2147483647, %v554
  %v557 = vsub.f32 0.0, %v556
  %v558 = vmul.f32 %v557, 1.442695
  %v559 = vpow.pop %v558
  %v560 = vadd.f32 %v559, 1.0
  %v561 = vlog2.pop %v560
  %v562 = vmul.f32 %v561, 0.6931472
  %v563 = vadd.f32 %v555, %v562
  %v565 = vlaneseq
  %v566 = vshrl.u32 %v565, 7
  %v567 = vsub.s32 0, %v566
  %v568 = vrot.slane %v563, %v567
  %v569 = vlaneseq
  %v570 = vshrl.u32 %v569, 7
  %v571 = vsub.s32 1, %v570
  %v572 = vrot.slane %v563, %v571
  %v573 = vlaneseq
  %v574 = vshrl.u32 %v573, 7
  %v575 = vsub.s32 2, %v574
  %v576 = vrot.slane %v563, %v575
  %v577 = vlaneseq
  %v578 = vshrl.u32 %v577, 7
  %v579 = vsub.s32 3, %v578
  %v580 = vrot.slane %v563, %v579
  %v585 = vsel %vm448, %v568, 0.0
  %v586 = vsel %vm448, %v572, 0.0
  %v587 = vadd.f32 %v585, %v586
  %v588 = vsel %vm448, %v576, 0.0
  %v589 = vadd.f32 %v587, %v588
  %v590 = vsel %vm448, %v580, 0.0
  %v591 = vadd.f32 %v589, %v590
  %592 = vadd.xlane.f32.xlu0 %v591
  %v593 = vpop.xlane.xlu0 %592
  %v594 = vrot.slane %v593, 4
  %v595 = vadd.f32 %v593, %v594
  %v596 = vrot.slane %v595, 2
  %v597 = vadd.f32 %v595, %v596
  %v598 = vrot.slane %v597, 1
  %v599 = vadd.f32 %v597, %v598
  %s600 = vtos %v599
  %v601 = vstv %s464
  %v602 = vrcp.pop %v601
  %s603 = vtos %v602
  %s604 = smul.f32 %s447, %s603
  %v605 = vrcp.pop 18.0
  %s606 = vtos %v605
  %s607 = smul.f32 %s604, %s606
  %v608 = vrcp.pop 512.0
  %s609 = vtos %v608
  %s610 = smul.f32 %s600, %s609
  %s611 = sadd.f32 %s607, %s610
  %v612 = vlaneseq
  %v613 = vand.u32 %v612, 127
  %vm614 = vcmp.eq.s32.totalorder %v613, 0
  %vm615 = vcmp.eq.s32.totalorder %v613, 1
  %vm616 = vcmp.eq.s32.totalorder %v613, 2
  %v617 = vstv %s611
  %v618 = vsel %vm616, %v617, 0.0
  %v619 = vstv %s610
  %v620 = vsel %vm615, %v619, %v618
  %v621 = vstv %s607
  %v622 = vsel %vm614, %v621, %v620
  %623 = vst [vmem:[%s6] sm:$0x1] %v622
  // Predicated region
  $region22: #{_pvnet_step.1} parent=0 // pred_check
    _
  $region23: #{_pvnet_step.1} parent=0 // pred_check_branch
    %625 = sbr.rel (0) target = $region25
  $region24: #{_pvnet_step.1} parent=0 // pred_region
    _
  $region25: #{_pvnet_step.1} parent=0 // pred_fallthru
    _
  // Predicated region
  $region26: #{_pvnet_step.1} parent=0 // pred_check
    _
  $region27: #{_pvnet_step.1} parent=0 // pred_check_branch
    %627 = sbr.rel (0) target = $region29
  $region28: #{_pvnet_step.1} parent=0 // pred_region
    _
  $region29: #{_pvnet_step.1} parent=0 // pred_fallthru
    _
  // Predicated region
  $region30: #{_pvnet_step.1} parent=0 // pred_check
    _
  $region31: #{_pvnet_step.1} parent=0 // pred_check_branch
    %629 = sbr.rel (0) target = $region33
  $region32: #{_pvnet_step.1} parent=0 // pred_region
    _
  $region33: #{_pvnet_step.1} parent=0 // pred_fallthru
    _
  // Predicated region
  $region34: #{_pvnet_step.1} parent=0 // pred_check
    _
  $region35: #{_pvnet_step.1} parent=0 // pred_check_branch
    %631 = sbr.rel (0) target = $region37
  $region36: #{_pvnet_step.1} parent=0 // pred_region
    _
  $region37: #{_pvnet_step.1} parent=0 // pred_fallthru
    _

</llo_original>
